<compile_context>
chip_gen: v6e
topology: v6e:2x2x1
jax: 0.10.0
libtpu: 0.0.40
codegen_flags: <defaults>
</compile_context>

<pallas_src>
import functools

import jax
import jax.numpy as jnp
from jax.experimental import pallas as pl
from jax.experimental.pallas import tpu as pltpu

BN_EPS = 1e-5


def _round_up(x, m):
    return (x + m - 1) // m * m


def _fused_kernel(x1_ref, x2_ref, x3_ref, p_ref, o_ref, s_ref, ss_ref, *, inv_count):
    # x1_ref, x2_ref, x3_ref: (3, TL)  one image's channel rows for this lane tile
    # p_ref:                  (8, 128) packed per-channel params
    #                          [:,0:3]=w1, [:,3:6]=w2, [:,6]=b2, [:,7]=gamma, [:,8]=beta
    # o_ref:                  (11, TL) output tile for this image
    # s_ref, ss_ref:          (8, 1)   persistent BN-stat accumulators (VMEM scratch)
    pss = pl.program_id(0)   # 0 = stats sweep, 1 = apply sweep
    img = pl.program_id(1)
    lt = pl.program_id(2)

    w1 = [p_ref[:, c:c + 1] for c in range(3)]        # (8, 1) each
    w2 = [p_ref[:, 3 + c:4 + c] for c in range(3)]
    b2 = p_ref[:, 6:7]
    gamma = p_ref[:, 7:8]
    beta = p_ref[:, 8:9]

    # conv1 (bias-free; bias cancels in train-mode BN) as 3 broadcast FMAs on
    # the VPU.  Needed by both sweeps; recomputed rather than retained (avoids
    # spilling an (8, Mp) live value across the whole grid).
    # TODO(synk): use stride-0 sublane-broadcast loads
    #   x1_ref[pl.ds(c, 8, stride=0), :]
    # to move the (1,TL)->(8,TL) broadcast onto the load slots once
    # Slice(stride=0) is available in this jax version.
    a = x1_ref[...]                                                   # (3, TL)
    v1 = w1[0] * a[0:1, :] + w1[1] * a[1:2, :] + w1[2] * a[2:3, :]    # (8, TL)

    @pl.when((pss == 0) & (img == 0) & (lt == 0))
    def _init():
        s_ref[...] = jnp.zeros_like(s_ref)
        ss_ref[...] = jnp.zeros_like(ss_ref)

    @pl.when(pss == 0)
    def _stats():
        # Zero-padded border / alignment lanes contribute 0 to both sums, and
        # inv_count counts only the true N*Hp*Wp positions.
        s_ref[...] += jnp.sum(v1, axis=1, keepdims=True)
        ss_ref[...] += jnp.sum(v1 * v1, axis=1, keepdims=True)

    @pl.when(pss == 1)
    def _apply():
        mean = s_ref[...] * inv_count
        # E[x^2] - E[x]^2 in f32; the clamp guards tiny negative round-off.
        # TODO(synk): switch to centered/Welford accumulation if activations
        # can have large per-channel means (catastrophic cancellation).
        var = jnp.maximum(ss_ref[...] * inv_count - mean * mean, 0.0)
        scale = gamma * jax.lax.rsqrt(var + BN_EPS)
        shift = beta - mean * scale + b2          # conv2 bias folded in once

        b = x2_ref[...]                                                   # (3, TL)
        v3 = w2[0] * b[0:1, :] + w2[1] * b[1:2, :] + w2[2] * b[2:3, :]    # (8, TL)
        v4 = jnp.clip(v1 * scale + v3 + shift, 0.0, 6.0)

        o_ref[0:8, :] = v4                 # full (8, TL) sublane tile, unmasked
        o_ref[8:11, :] = x3_ref[...]       # own sublane tile; no cross-image overlap
        # TODO(synk): on v7x, route the x3 passthrough as HBM->HBM async copies
        # (memory_space=pl.ANY) to free VMEM and vector-slot work.


def _fused_forward(x1p, x2p, x3r, packed, n_imgs, hp, wp, lane_tile, mp_pad):
    n_lt = mp_pad // lane_tile
    inv_count = 1.0 / float(n_imgs * hp * wp)
    kernel = functools.partial(_fused_kernel, inv_count=inv_count)

    # x2/x3/out index maps return block (0,0,0) during the stats sweep (pass
    # index p==0): the block index never changes there, so no DMA traffic is
    # generated for them until the apply sweep, and the output block is only
    # flushed after it has been written at (p=1, img=0, lt=0).
    x1_spec = pl.BlockSpec((None, 3, lane_tile), lambda p, n, l: (n, 0, l))
    x2_spec = pl.BlockSpec((None, 3, lane_tile), lambda p, n, l: (n * p, 0, l * p))
    x3_spec = pl.BlockSpec((None, 3, lane_tile), lambda p, n, l: (n * p, 0, l * p))
    prm_spec = pl.BlockSpec((8, 128), lambda p, n, l: (0, 0))
    out_spec = pl.BlockSpec((None, 11, lane_tile), lambda p, n, l: (n * p, 0, l * p))

    return pl.pallas_call(
        kernel,
        out_shape=jax.ShapeDtypeStruct((n_imgs, 11, mp_pad), jnp.float32),
        grid_spec=pltpu.PrefetchScalarGridSpec(
            num_scalar_prefetch=0,
            grid=(2, n_imgs, n_lt),
            in_specs=[x1_spec, x2_spec, x3_spec, prm_spec],
            out_specs=out_spec,
            scratch_shapes=[pltpu.VMEM((8, 1), jnp.float32),    # sum(v1)
                            pltpu.VMEM((8, 1), jnp.float32)],   # sum(v1^2)
        ),
        # TODO(synk): on v7x, mark (img, lane) axes "parallel" and combine the
        # per-core partial BN sums (CMEM / VMEM_SHARED) to use both TensorCores.
        compiler_params=pltpu.CompilerParams(
            dimension_semantics=("arbitrary", "arbitrary", "arbitrary"),
            vmem_limit_bytes=32 * 1024 * 1024,
        ),
    )(x1p, x2p, x3r, packed)


def init_params(key):
    k1, k2, k3, k4 = jax.random.split(key, 4)
    cin, cout = 3, 8
    # deterministic stand-in for PyTorch's kaiming-uniform conv init
    bound = 1.0 / jnp.sqrt(float(cin))  # fan_in = cin * 1 * 1
    w1 = jax.random.uniform(k1, (cout, cin), jnp.float32, -bound, bound)
    b1 = jax.random.uniform(k2, (cout,), jnp.float32, -bound, bound)  # cancels in BN
    w2 = jax.random.uniform(k3, (cout, cin), jnp.float32, -bound, bound)
    b2 = jax.random.uniform(k4, (cout,), jnp.float32, -bound, bound)
    gamma1 = jnp.ones((cout,), jnp.float32)   # BatchNorm2d default weight
    beta1 = jnp.zeros((cout,), jnp.float32)   # BatchNorm2d default bias

    # Pack every per-channel parameter the kernel needs into one (8, 128)
    # array: one small DMA, one unmasked vreg row of loads.
    packed = jnp.zeros((cout, 128), jnp.float32)
    packed = packed.at[:, 0:3].set(w1)
    packed = packed.at[:, 3:6].set(w2)
    packed = packed.at[:, 6].set(b2)
    packed = packed.at[:, 7].set(gamma1)
    packed = packed.at[:, 8].set(beta1)
    return dict(packed=packed, w1=w1, b1=b1, w2=w2, b2=b2,
                gamma1=gamma1, beta1=beta1)


@jax.jit
def model_forward(params, x1, x2, x3):
    # x1, x2: (N, 3, H, W) NCHW;  x3: (N, 3, H+2, W+2) NCHW
    N, C, H, W = x1.shape
    Hp, Wp = H + 2, W + 2
    Mp = Hp * Wp
    lane_tile = min(512, _round_up(Mp, 128))   # 512..2048 is the v6e sweet spot
    Mp_pad = _round_up(Mp, lane_tile)

    # Conv2d(kernel=1, padding=1) == zero-pad spatially then a per-pixel channel
    # mix; lanes are additionally zero-padded to a 128-aligned tile multiple so
    # every in-kernel load/compute/store row is fully unmasked.
    # TODO(synk): fold this spatial zero-pad into an in-kernel strided DMA
    # (memory_space=pl.ANY) to remove one extra HBM read+write of x1/x2.
    def prep(x):
        xp = jnp.pad(x, ((0, 0), (0, 0), (1, 1), (1, 1))).reshape(N, 3, Mp)
        return jnp.pad(xp, ((0, 0), (0, 0), (0, Mp_pad - Mp)))

    x1p = prep(x1)
    x2p = prep(x2)
    x3r = jnp.pad(x3.reshape(N, 3, Mp), ((0, 0), (0, 0), (0, Mp_pad - Mp)))

    out = _fused_forward(x1p, x2p, x3r, params["packed"], N, Hp, Wp, lane_tile, Mp_pad)
    return out[:, :, :Mp].reshape(N, 11, Hp, Wp)


def _reference(params, x1, x2, x3):
    # Pure-JAX reference of the PyTorch forward (training-mode BN), with
    # conv1's bias applied explicitly.
    def conv1x1_pad1(x, w, b):
        xp = jnp.pad(x, ((0, 0), (0, 0), (1, 1), (1, 1)))           # (N,3,Hp,Wp)
        y = (w[None, :, :, None, None] * xp[:, None, :, :, :]).sum(axis=2)
        return y + b[None, :, None, None]                            # (N,8,Hp,Wp)

    v1 = conv1x1_pad1(x1, params["w1"], params["b1"])
    mean = jnp.mean(v1, axis=(0, 2, 3), keepdims=True)
    var = jnp.mean((v1 - mean) ** 2, axis=(0, 2, 3), keepdims=True)  # biased
    v2 = (v1 - mean) * jax.lax.rsqrt(var + BN_EPS)
    v2 = v2 * params["gamma1"][None, :, None, None] + params["beta1"][None, :, None, None]
    v3 = conv1x1_pad1(x2, params["w2"], params["b2"])
    v4 = jnp.clip(v2 + v3, 0.0, 6.0)
    return jnp.concatenate([v4, x3], axis=1)


if __name__ == "__main__":
    key = jax.random.PRNGKey(0)
    kp, kd = jax.random.split(key)
    params = init_params(kp)

    # (2, 16x16): single lane tile, multiple images.
    # (2, 30x30): Hp*Wp = 1024 -> two 512-wide lane tiles per image
    #             (exercises the tiled two-sweep BN-stats path).
    for (N, H, W) in [(2, 16, 16), (2, 30, 30)]:
        kk1, kk2, kk3 = jax.random.split(jax.random.fold_in(kd, H), 3)
        x1 = jax.random.normal(kk1, (N, 3, H, W), jnp.float32)
        x2 = jax.random.normal(kk2, (N, 3, H, W), jnp.float32)
        x3 = jax.random.normal(kk3, (N, 3, H + 2, W + 2), jnp.float32)

        out = model_forward(params, x1, x2, x3)
        jax.block_until_ready(out)
        assert out.shape == (N, 11, H + 2, W + 2), out.shape

        ref = _reference(params, x1, x2, x3)
        max_err = float(jnp.max(jnp.abs(out - ref)))
        assert max_err < 1e-3, f"max abs error {max_err} at {(N, H, W)}"

    print("KERNEL_OK")
</pallas_src>

<mosaic_0001>
module attributes {stable_mosaic.version = 11 : i64} {
  func.func @_fused_kernel(%arg0: i32, %arg1: i32, %arg2: i32, %arg3: memref<1x3x384xf32, #tpu.memory_space<vmem>>, %arg4: memref<1x3x384xf32, #tpu.memory_space<vmem>>, %arg5: memref<1x3x384xf32, #tpu.memory_space<vmem>>, %arg6: memref<8x128xf32, #tpu.memory_space<vmem>>, %arg7: memref<1x11x384xf32, #tpu.memory_space<vmem>>, %arg8: memref<8x1xf32, #tpu.memory_space<vmem>>, %arg9: memref<8x1xf32, #tpu.memory_space<vmem>>) attributes {dimension_semantics = [#tpu.dimension_semantics<arbitrary>, #tpu.dimension_semantics<arbitrary>, #tpu.dimension_semantics<arbitrary>], iteration_bounds = array<i64: 2, 2, 1>, scalar_prefetch = 0 : i64, scratch_operands = 2 : i64, tpu.core_type = #tpu.core_type<tc>, window_params = [{transform_indices = @transform_0, window_bounds = array<i64: 1, 3, 384>}, {transform_indices = @transform_1, window_bounds = array<i64: 1, 3, 384>}, {transform_indices = @transform_2, window_bounds = array<i64: 1, 3, 384>}, {pipeline_mode = #tpu.pipeline_mode<synchronous>, transform_indices = @transform_3, window_bounds = array<i64: 8, 128>}, {transform_indices = @transform_4, window_bounds = array<i64: 1, 11, 384>}]} {
    %c0 = arith.constant 0 : index
    %c0_0 = arith.constant 0 : index
    %0 = vector.load %arg6[%c0, %c0_0] : memref<8x128xf32, #tpu.memory_space<vmem>>, vector<8x1xf32>
    %c0_1 = arith.constant 0 : index
    %c1 = arith.constant 1 : index
    %1 = vector.load %arg6[%c0_1, %c1] : memref<8x128xf32, #tpu.memory_space<vmem>>, vector<8x1xf32>
    %c0_2 = arith.constant 0 : index
    %c2 = arith.constant 2 : index
    %2 = vector.load %arg6[%c0_2, %c2] : memref<8x128xf32, #tpu.memory_space<vmem>>, vector<8x1xf32>
    %c0_3 = arith.constant 0 : index
    %c3 = arith.constant 3 : index
    %3 = vector.load %arg6[%c0_3, %c3] : memref<8x128xf32, #tpu.memory_space<vmem>>, vector<8x1xf32>
    %c0_4 = arith.constant 0 : index
    %c4 = arith.constant 4 : index
    %4 = vector.load %arg6[%c0_4, %c4] : memref<8x128xf32, #tpu.memory_space<vmem>>, vector<8x1xf32>
    %c0_5 = arith.constant 0 : index
    %c5 = arith.constant 5 : index
    %5 = vector.load %arg6[%c0_5, %c5] : memref<8x128xf32, #tpu.memory_space<vmem>>, vector<8x1xf32>
    %c0_6 = arith.constant 0 : index
    %c6 = arith.constant 6 : index
    %6 = vector.load %arg6[%c0_6, %c6] : memref<8x128xf32, #tpu.memory_space<vmem>>, vector<8x1xf32>
    %c0_7 = arith.constant 0 : index
    %c7 = arith.constant 7 : index
    %7 = vector.load %arg6[%c0_7, %c7] : memref<8x128xf32, #tpu.memory_space<vmem>>, vector<8x1xf32>
    %c0_8 = arith.constant 0 : index
    %c8 = arith.constant 8 : index
    %8 = vector.load %arg6[%c0_8, %c8] : memref<8x128xf32, #tpu.memory_space<vmem>>, vector<8x1xf32>
    %c0_9 = arith.constant 0 : index
    %c0_10 = arith.constant 0 : index
    %c0_11 = arith.constant 0 : index
    %9 = vector.load %arg3[%c0_9, %c0_10, %c0_11] : memref<1x3x384xf32, #tpu.memory_space<vmem>>, vector<1x3x384xf32>
    %10 = vector.shape_cast %9 : vector<1x3x384xf32> to vector<3x384xf32>
    %11 = vector.extract_strided_slice %10 {offsets = [0, 0], sizes = [1, 384], strides = [1, 1]} : vector<3x384xf32> to vector<1x384xf32>
    %12 = vector.broadcast %0 : vector<8x1xf32> to vector<8x384xf32>
    %13 = vector.broadcast %11 : vector<1x384xf32> to vector<8x384xf32>
    %14 = arith.mulf %12, %13 : vector<8x384xf32>
    %15 = vector.extract_strided_slice %10 {offsets = [1, 0], sizes = [1, 384], strides = [1, 1]} : vector<3x384xf32> to vector<1x384xf32>
    %16 = vector.broadcast %1 : vector<8x1xf32> to vector<8x384xf32>
    %17 = vector.broadcast %15 : vector<1x384xf32> to vector<8x384xf32>
    %18 = arith.mulf %16, %17 : vector<8x384xf32>
    %19 = arith.addf %14, %18 : vector<8x384xf32>
    %20 = vector.extract_strided_slice %10 {offsets = [2, 0], sizes = [1, 384], strides = [1, 1]} : vector<3x384xf32> to vector<1x384xf32>
    %21 = vector.broadcast %2 : vector<8x1xf32> to vector<8x384xf32>
    %22 = vector.broadcast %20 : vector<1x384xf32> to vector<8x384xf32>
    %23 = arith.mulf %21, %22 : vector<8x384xf32>
    %24 = arith.addf %19, %23 : vector<8x384xf32>
    %c0_i32 = arith.constant 0 : i32
    %25 = arith.cmpi eq, %arg0, %c0_i32 : i32
    %c0_i32_12 = arith.constant 0 : i32
    %26 = arith.cmpi eq, %arg1, %c0_i32_12 : i32
    %27 = arith.andi %25, %26 : i1
    %c0_i32_13 = arith.constant 0 : i32
    %28 = arith.cmpi eq, %arg2, %c0_i32_13 : i32
    %29 = arith.andi %27, %28 : i1
    %30 = arith.extui %29 : i1 to i32
    %c0_i32_14 = arith.constant 0 : i32
    %31 = arith.cmpi ne, %30, %c0_i32_14 : i32
    scf.if %31 {
      %cst = arith.constant 0.000000e+00 : f32
      %38 = vector.broadcast %cst : f32 to vector<8x1xf32>
      %c0_18 = arith.constant 0 : index
      %c0_19 = arith.constant 0 : index
      %39 = vector.load %arg8[%c0_18, %c0_19] : memref<8x1xf32, #tpu.memory_space<vmem>>, vector<8x1xf32>
      tpu.vector_store %arg8[%c0_18, %c0_19], %38 {strides = array<i32>} : memref<8x1xf32, #tpu.memory_space<vmem>>, vector<8x1xf32>,
      %cst_20 = arith.constant 0.000000e+00 : f32
      %40 = vector.broadcast %cst_20 : f32 to vector<8x1xf32>
      %c0_21 = arith.constant 0 : index
      %c0_22 = arith.constant 0 : index
      %41 = vector.load %arg9[%c0_21, %c0_22] : memref<8x1xf32, #tpu.memory_space<vmem>>, vector<8x1xf32>
      tpu.vector_store %arg9[%c0_21, %c0_22], %40 {strides = array<i32>} : memref<8x1xf32, #tpu.memory_space<vmem>>, vector<8x1xf32>,
    } else {
    }
    %c0_i32_15 = arith.constant 0 : i32
    %32 = arith.cmpi eq, %arg0, %c0_i32_15 : i32
    %33 = arith.extui %32 : i1 to i32
    %c0_i32_16 = arith.constant 0 : i32
    %34 = arith.cmpi ne, %33, %c0_i32_16 : i32
    scf.if %34 {
      %c0_18 = arith.constant 0 : index
      %c0_19 = arith.constant 0 : index
      %38 = vector.load %arg8[%c0_18, %c0_19] : memref<8x1xf32, #tpu.memory_space<vmem>>, vector<8x1xf32>
      %cst = arith.constant dense<0.000000e+00> : vector<8xf32>
      %39 = vector.multi_reduction <add>, %24, %cst [1] : vector<8x384xf32> to vector<8xf32>
      %40 = vector.shape_cast %39 : vector<8xf32> to vector<8x1xf32>
      %41 = arith.addf %38, %40 : vector<8x1xf32>
      %c0_20 = arith.constant 0 : index
      %c0_21 = arith.constant 0 : index
      %42 = vector.load %arg8[%c0_20, %c0_21] : memref<8x1xf32, #tpu.memory_space<vmem>>, vector<8x1xf32>
      tpu.vector_store %arg8[%c0_20, %c0_21], %41 {strides = array<i32>} : memref<8x1xf32, #tpu.memory_space<vmem>>, vector<8x1xf32>,
      %c0_22 = arith.constant 0 : index
      %c0_23 = arith.constant 0 : index
      %43 = vector.load %arg9[%c0_22, %c0_23] : memref<8x1xf32, #tpu.memory_space<vmem>>, vector<8x1xf32>
      %44 = arith.mulf %24, %24 : vector<8x384xf32>
      %cst_24 = arith.constant dense<0.000000e+00> : vector<8xf32>
      %45 = vector.multi_reduction <add>, %44, %cst_24 [1] : vector<8x384xf32> to vector<8xf32>
      %46 = vector.shape_cast %45 : vector<8xf32> to vector<8x1xf32>
      %47 = arith.addf %43, %46 : vector<8x1xf32>
      %c0_25 = arith.constant 0 : index
      %c0_26 = arith.constant 0 : index
      %48 = vector.load %arg9[%c0_25, %c0_26] : memref<8x1xf32, #tpu.memory_space<vmem>>, vector<8x1xf32>
      tpu.vector_store %arg9[%c0_25, %c0_26], %47 {strides = array<i32>} : memref<8x1xf32, #tpu.memory_space<vmem>>, vector<8x1xf32>,
    } else {
    }
    %c1_i32 = arith.constant 1 : i32
    %35 = arith.cmpi eq, %arg0, %c1_i32 : i32
    %36 = arith.extui %35 : i1 to i32
    %c0_i32_17 = arith.constant 0 : i32
    %37 = arith.cmpi ne, %36, %c0_i32_17 : i32
    scf.if %37 {
      %c0_18 = arith.constant 0 : index
      %c0_19 = arith.constant 0 : index
      %38 = vector.load %arg8[%c0_18, %c0_19] : memref<8x1xf32, #tpu.memory_space<vmem>>, vector<8x1xf32>
      %cst = arith.constant 0.00154320989 : f32
      %39 = vector.broadcast %cst : f32 to vector<8x1xf32>
      %40 = arith.mulf %38, %39 : vector<8x1xf32>
      %c0_20 = arith.constant 0 : index
      %c0_21 = arith.constant 0 : index
      %41 = vector.load %arg9[%c0_20, %c0_21] : memref<8x1xf32, #tpu.memory_space<vmem>>, vector<8x1xf32>
      %cst_22 = arith.constant 0.00154320989 : f32
      %42 = vector.broadcast %cst_22 : f32 to vector<8x1xf32>
      %43 = arith.mulf %41, %42 : vector<8x1xf32>
      %44 = arith.mulf %40, %40 : vector<8x1xf32>
      %45 = arith.subf %43, %44 : vector<8x1xf32>
      %cst_23 = arith.constant 0.000000e+00 : f32
      %46 = vector.broadcast %cst_23 : f32 to vector<8x1xf32>
      %47 = arith.maximumf %45, %46 : vector<8x1xf32>
      %cst_24 = arith.constant 9.99999974E-6 : f32
      %48 = vector.broadcast %cst_24 : f32 to vector<8x1xf32>
      %49 = arith.addf %47, %48 : vector<8x1xf32>
      %50 = math.rsqrt %49 : vector<8x1xf32>
      %51 = arith.mulf %7, %50 : vector<8x1xf32>
      %52 = arith.mulf %40, %51 : vector<8x1xf32>
      %53 = arith.subf %8, %52 : vector<8x1xf32>
      %54 = arith.addf %53, %6 : vector<8x1xf32>
      %c0_25 = arith.constant 0 : index
      %c0_26 = arith.constant 0 : index
      %c0_27 = arith.constant 0 : index
      %55 = vector.load %arg4[%c0_25, %c0_26, %c0_27] : memref<1x3x384xf32, #tpu.memory_space<vmem>>, vector<1x3x384xf32>
      %56 = vector.shape_cast %55 : vector<1x3x384xf32> to vector<3x384xf32>
      %57 = vector.extract_strided_slice %56 {offsets = [0, 0], sizes = [1, 384], strides = [1, 1]} : vector<3x384xf32> to vector<1x384xf32>
      %58 = vector.broadcast %3 : vector<8x1xf32> to vector<8x384xf32>
      %59 = vector.broadcast %57 : vector<1x384xf32> to vector<8x384xf32>
      %60 = arith.mulf %58, %59 : vector<8x384xf32>
      %61 = vector.extract_strided_slice %56 {offsets = [1, 0], sizes = [1, 384], strides = [1, 1]} : vector<3x384xf32> to vector<1x384xf32>
      %62 = vector.broadcast %4 : vector<8x1xf32> to vector<8x384xf32>
      %63 = vector.broadcast %61 : vector<1x384xf32> to vector<8x384xf32>
      %64 = arith.mulf %62, %63 : vector<8x384xf32>
      %65 = arith.addf %60, %64 : vector<8x384xf32>
      %66 = vector.extract_strided_slice %56 {offsets = [2, 0], sizes = [1, 384], strides = [1, 1]} : vector<3x384xf32> to vector<1x384xf32>
      %67 = vector.broadcast %5 : vector<8x1xf32> to vector<8x384xf32>
      %68 = vector.broadcast %66 : vector<1x384xf32> to vector<8x384xf32>
      %69 = arith.mulf %67, %68 : vector<8x384xf32>
      %70 = arith.addf %65, %69 : vector<8x384xf32>
      %71 = vector.broadcast %51 : vector<8x1xf32> to vector<8x384xf32>
      %72 = arith.mulf %24, %71 : vector<8x384xf32>
      %73 = arith.addf %72, %70 : vector<8x384xf32>
      %74 = vector.broadcast %54 : vector<8x1xf32> to vector<8x384xf32>
      %75 = arith.addf %73, %74 : vector<8x384xf32>
      %cst_28 = arith.constant 0.000000e+00 : f32
      %cst_29 = arith.constant 6.000000e+00 : f32
      %76 = vector.broadcast %cst_28 : f32 to vector<8x384xf32>
      %77 = arith.maximumf %76, %75 : vector<8x384xf32>
      %78 = vector.broadcast %cst_29 : f32 to vector<8x384xf32>
      %79 = arith.minimumf %78, %77 : vector<8x384xf32>
      %c0_30 = arith.constant 0 : index
      %c0_31 = arith.constant 0 : index
      %c0_32 = arith.constant 0 : index
      %80 = vector.load %arg7[%c0_30, %c0_31, %c0_32] : memref<1x11x384xf32, #tpu.memory_space<vmem>>, vector<1x8x384xf32>
      %81 = vector.shape_cast %80 : vector<1x8x384xf32> to vector<8x384xf32>
      %82 = vector.shape_cast %79 : vector<8x384xf32> to vector<1x8x384xf32>
      tpu.vector_store %arg7[%c0_30, %c0_31, %c0_32], %82 {strides = array<i32>} : memref<1x11x384xf32, #tpu.memory_space<vmem>>, vector<1x8x384xf32>,
      %c0_33 = arith.constant 0 : index
      %c0_34 = arith.constant 0 : index
      %c0_35 = arith.constant 0 : index
      %83 = vector.load %arg5[%c0_33, %c0_34, %c0_35] : memref<1x3x384xf32, #tpu.memory_space<vmem>>, vector<1x3x384xf32>
      %84 = vector.shape_cast %83 : vector<1x3x384xf32> to vector<3x384xf32>
      %c0_36 = arith.constant 0 : index
      %c8_37 = arith.constant 8 : index
      %c0_38 = arith.constant 0 : index
      %85 = vector.load %arg7[%c0_36, %c8_37, %c0_38] : memref<1x11x384xf32, #tpu.memory_space<vmem>>, vector<1x3x384xf32>
      %86 = vector.shape_cast %85 : vector<1x3x384xf32> to vector<3x384xf32>
      %87 = vector.shape_cast %84 : vector<3x384xf32> to vector<1x3x384xf32>
      tpu.vector_store %arg7[%c0_36, %c8_37, %c0_38], %87 {strides = array<i32>} : memref<1x11x384xf32, #tpu.memory_space<vmem>>, vector<1x3x384xf32>,
    } else {
    }
    return
  }
  func.func @transform_0(%arg0: i32, %arg1: i32, %arg2: i32) -> (i32, i32, i32) {
    %c0_i32 = arith.constant 0 : i32
    %c0_i32_0 = arith.constant 0 : i32
    return %arg1, %c0_i32, %arg2 : i32, i32, i32
  }
  func.func @transform_1(%arg0: i32, %arg1: i32, %arg2: i32) -> (i32, i32, i32) {
    %0 = arith.muli %arg1, %arg0 : i32
    %1 = arith.muli %arg2, %arg0 : i32
    %c0_i32 = arith.constant 0 : i32
    %c0_i32_0 = arith.constant 0 : i32
    return %0, %c0_i32, %1 : i32, i32, i32
  }
  func.func @transform_2(%arg0: i32, %arg1: i32, %arg2: i32) -> (i32, i32, i32) {
    %0 = arith.muli %arg1, %arg0 : i32
    %1 = arith.muli %arg2, %arg0 : i32
    %c0_i32 = arith.constant 0 : i32
    %c0_i32_0 = arith.constant 0 : i32
    return %0, %c0_i32, %1 : i32, i32, i32
  }
  func.func @transform_3(%arg0: i32, %arg1: i32, %arg2: i32) -> (i32, i32) {
    %c0_i32 = arith.constant 0 : i32
    %c0_i32_0 = arith.constant 0 : i32
    %c0_i32_1 = arith.constant 0 : i32
    return %c0_i32, %c0_i32_0 : i32, i32
  }
  func.func @transform_4(%arg0: i32, %arg1: i32, %arg2: i32) -> (i32, i32, i32) {
    %0 = arith.muli %arg1, %arg0 : i32
    %1 = arith.muli %arg2, %arg0 : i32
    %c0_i32 = arith.constant 0 : i32
    %c0_i32_0 = arith.constant 0 : i32
    return %0, %c0_i32, %1 : i32, i32, i32
  }
}

</mosaic_0001>

<llo_original>
// kernel: model_forward.1
$region0: #{model_forward.1}
  #allocation0 [shape = 'u32[]', space=smem, size = 0x4, offset = 0x4, fixed_abs, tag = 'smem constant byte address 0x4 - core index']
  #allocation1 [shape = 'u32[144,128]{1,0:T(1,128)}', space=vmem, size = 0x12000, scoped, tag = 'internal scratch']
  #allocation2 [shape = 'f32[8,1]{1,0:T(8,128)}', space=vmem, size = 0x1000, scoped, tag = 'scratch operand']
  #allocation3 [shape = 'f32[8,1]{1,0:T(8,128)}', space=vmem, size = 0x1000, scoped, tag = 'scratch operand']
  %s0 = inlined_call_operand.vmem [shape: f32[2,3,384], index: 0, kind: input, shape index: {}]
  %s1 = inlined_call_operand.vmem [shape: f32[2,3,384], index: 1, kind: input, shape index: {}]
  %s2 = inlined_call_operand.vmem [shape: f32[2,3,384], index: 2, kind: input, shape index: {}]
  %s3 = inlined_call_operand.vmem [shape: f32[8,128], index: 3, kind: input, shape index: {}]
  %s4 = inlined_call_operand.vmem [shape: f32[2,11,384], index: 4, kind: output, shape index: {}]
  %s5 = sld [smem:[#allocation0]]
  $region61: #{model_forward.1} parent=0
    _
  %s7 = ssub.s32 1, %s5
  %s8 = scalar_select 0, %s7, %s5
  loop: start=0, step=1, limit=6
  $region2: #{model_forward.1} parent=0 // loop_pre_header
    _
  $region3: #{model_forward.1} parent=0 // loop_header
    %s10 = sphi 0, %s14
    %p11 = scmp.ge.s32.totalorder %s10, 6
    %s17 = sphi 0, %s36
    %s18 = sphi 0, %s32
    %s19 = sphi 0, %s28
    %s20 = sphi 0, %s17
    %s21 = sphi 0, %s18
    %s22 = sphi 0, %s19
    %s23 = sphi 0, %s20
    %s24 = sphi 0, %s21
    %s25 = sphi 0, %s22
    %s41 = sphi 0, %s43
    %s44 = sphi 0, %s41
    %s45 = sphi 0, %s44
    %s61 = sphi 0, %s45
    %s73 = sphi 0, %s75
    %s76 = sphi 0, %s73
    %s77 = sphi 0, %s76
    %s93 = sphi 0, %s77
    %s105 = sphi 0, %s107
    %s108 = sphi 0, %s105
    %s109 = sphi 0, %s108
    %s125 = sphi 0, %s109
    %s129 = sphi 0, %s129
    %s131 = sphi 0, %s129
    %s132 = sphi 0, %s131
    %s146 = sphi 0, %s132
    %s158 = sphi 0, %s160
    %s161 = sphi 0, %s158
    %s162 = sphi 0, %s161
    %s178 = sphi 0, %s162
  $region4: #{model_forward.1} parent=0 // loop_header_branch
    %13 = sbr.rel (%p11) target = $region8
  $region5: #{model_forward.1} parent=0 // loop_body
    %s15 = ssub.s32 %s10, 1
    %s16 = ssub.s32 %s10, 2
    %s26 = sadd.s32 1, %s19
    %p27 = scmp.ge.s32.totalorder %s26, 1
    %s28 = scalar_select %p27, 0, %s26
    %s29 = sadd.s32 1, %s18
    %s30 = scalar_select %p27, %s29, %s18
    %p31 = scmp.ge.s32.totalorder %s30, 2
    %s32 = scalar_select %p31, 0, %s30
    %s33 = sadd.s32 1, %s17
    %s34 = scalar_select %p31, %s33, %s17
    %p35 = scmp.ge.s32.totalorder %s34, 2
    %s36 = scalar_select %p35, 0, %s34
    %s37 = ssub.s32 %s18, %s32
    %s38 = ssub.s32 %s19, %s28
    %s39 = sor.u32 %s37, %s38
    %p40 = scmp.eq.s32.totalorder %s39, 0
    %s42 = sadd.s32 %s41, 1
    %s43 = scalar_select %p40, %s41, %s42
    %p46 = pneg %p40
    %p47 = scmp.eq.s32.totalorder %s10, 3
    %p48 = por %p46, %p47
    %p49 = scmp.ne.s32.totalorder %s41, %s44
    %p50 = scmp.eq.s32.totalorder %s10, 0
    %p51 = por %p49, %p50
    %p52 = scmp.ne.s32.totalorder %s41, %s44
    %p53 = scmp.eq.s32.totalorder %s15, 3
    %p54 = por %p52, %p53
    %p55 = scmp.ne.s32.totalorder %s44, %s45
    %p56 = scmp.eq.s32.totalorder %s15, 0
    %p57 = por %p55, %p56
    %p58 = scmp.ne.s32.totalorder %s44, %s45
    %p59 = scmp.eq.s32.totalorder %s16, 3
    %p60 = por %p58, %p59
    %p62 = scmp.ne.s32.totalorder %s45, %s61
    %p63 = scmp.eq.s32.totalorder %s16, 0
    %p64 = por %p62, %p63
    %s65 = smul.u32 %s18, %s17
    %s66 = smul.u32 %s19, %s17
    %s67 = smul.u32 %s32, %s36
    %s68 = smul.u32 %s28, %s36
    %s69 = ssub.s32 %s65, %s67
    %s70 = ssub.s32 %s66, %s68
    %s71 = sor.u32 %s69, %s70
    %p72 = scmp.eq.s32.totalorder %s71, 0
    %s74 = sadd.s32 %s73, 1
    %s75 = scalar_select %p72, %s73, %s74
    %p78 = pneg %p72
    %p79 = scmp.eq.s32.totalorder %s10, 3
    %p80 = por %p78, %p79
    %p81 = scmp.ne.s32.totalorder %s73, %s76
    %p82 = scmp.eq.s32.totalorder %s10, 0
    %p83 = por %p81, %p82
    %p84 = scmp.ne.s32.totalorder %s73, %s76
    %p85 = scmp.eq.s32.totalorder %s15, 3
    %p86 = por %p84, %p85
    %p87 = scmp.ne.s32.totalorder %s76, %s77
    %p88 = scmp.eq.s32.totalorder %s15, 0
    %p89 = por %p87, %p88
    %p90 = scmp.ne.s32.totalorder %s76, %s77
    %p91 = scmp.eq.s32.totalorder %s16, 3
    %p92 = por %p90, %p91
    %p94 = scmp.ne.s32.totalorder %s77, %s93
    %p95 = scmp.eq.s32.totalorder %s16, 0
    %p96 = por %p94, %p95
    %s97 = smul.u32 %s18, %s17
    %s98 = smul.u32 %s19, %s17
    %s99 = smul.u32 %s32, %s36
    %s100 = smul.u32 %s28, %s36
    %s101 = ssub.s32 %s97, %s99
    %s102 = ssub.s32 %s98, %s100
    %s103 = sor.u32 %s101, %s102
    %p104 = scmp.eq.s32.totalorder %s103, 0
    %s106 = sadd.s32 %s105, 1
    %s107 = scalar_select %p104, %s105, %s106
    %p110 = pneg %p104
    %p111 = scmp.eq.s32.totalorder %s10, 3
    %p112 = por %p110, %p111
    %p113 = scmp.ne.s32.totalorder %s105, %s108
    %p114 = scmp.eq.s32.totalorder %s10, 0
    %p115 = por %p113, %p114
    %p116 = scmp.ne.s32.totalorder %s105, %s108
    %p117 = scmp.eq.s32.totalorder %s15, 3
    %p118 = por %p116, %p117
    %p119 = scmp.ne.s32.totalorder %s108, %s109
    %p120 = scmp.eq.s32.totalorder %s15, 0
    %p121 = por %p119, %p120
    %p122 = scmp.ne.s32.totalorder %s108, %s109
    %p123 = scmp.eq.s32.totalorder %s16, 3
    %p124 = por %p122, %p123
    %p126 = scmp.ne.s32.totalorder %s109, %s125
    %p127 = scmp.eq.s32.totalorder %s16, 0
    %p128 = por %p126, %p127
    %s130 = sadd.s32 %s129, 1
    %p133 = scmp.eq.s32.totalorder %s10, 3
    %p134 = scmp.ne.s32.totalorder %s129, %s131
    %p135 = scmp.eq.s32.totalorder %s10, 0
    %p136 = por %p134, %p135
    %p137 = scmp.ne.s32.totalorder %s129, %s131
    %p138 = scmp.eq.s32.totalorder %s15, 3
    %p139 = por %p137, %p138
    %p140 = scmp.ne.s32.totalorder %s131, %s132
    %p141 = scmp.eq.s32.totalorder %s15, 0
    %p142 = por %p140, %p141
    %p143 = scmp.ne.s32.totalorder %s131, %s132
    %p144 = scmp.eq.s32.totalorder %s16, 3
    %p145 = por %p143, %p144
    %p147 = scmp.ne.s32.totalorder %s132, %s146
    %p148 = scmp.eq.s32.totalorder %s16, 0
    %p149 = por %p147, %p148
    %s150 = smul.u32 %s18, %s17
    %s151 = smul.u32 %s19, %s17
    %s152 = smul.u32 %s32, %s36
    %s153 = smul.u32 %s28, %s36
    %s154 = ssub.s32 %s150, %s152
    %s155 = ssub.s32 %s151, %s153
    %s156 = sor.u32 %s154, %s155
    %p157 = scmp.eq.s32.totalorder %s156, 0
    %s159 = sadd.s32 %s158, 1
    %s160 = scalar_select %p157, %s158, %s159
    %p163 = pneg %p157
    %p164 = scmp.eq.s32.totalorder %s10, 3
    %p165 = por %p163, %p164
    %p166 = scmp.ne.s32.totalorder %s158, %s161
    %p167 = scmp.eq.s32.totalorder %s10, 0
    %p168 = por %p166, %p167
    %p169 = scmp.ne.s32.totalorder %s158, %s161
    %p170 = scmp.eq.s32.totalorder %s15, 3
    %p171 = por %p169, %p170
    %p172 = scmp.ne.s32.totalorder %s161, %s162
    %p173 = scmp.eq.s32.totalorder %s15, 0
    %p174 = por %p172, %p173
    %p175 = scmp.ne.s32.totalorder %s161, %s162
    %p176 = scmp.eq.s32.totalorder %s16, 3
    %p177 = por %p175, %p176
    %p179 = scmp.ne.s32.totalorder %s162, %s178
    %p180 = scmp.eq.s32.totalorder %s16, 0
    %p181 = por %p179, %p180
    %p182 = scmp.le.s32.totalorder 1, %s10
    %p183 = scmp.lt.s32.totalorder %s10, 5
    %p184 = pnand %p182, %p183
    %p185 = pneg %p184
    // Predicated region
    $region9: #{model_forward.1} parent=5 // pred_check
      _
    $region10: #{model_forward.1} parent=5 // pred_check_branch
      %187 = sbr.rel (%p184) target = $region12
    $region11: #{model_forward.1} parent=5 // pred_region
      %s188 = ssub.s32 %s10, 1
      // Predicated region
      $region13: #{model_forward.1} parent=11 // pred_check
        %p189 = pneg %p142
      $region14: #{model_forward.1} parent=11 // pred_check_branch
        %191 = sbr.rel (%p189) target = $region16
      $region15: #{model_forward.1} parent=11 // pred_region
        _
      $region16: #{model_forward.1} parent=11 // pred_fallthru
        _
    $region12: #{model_forward.1} parent=5 // pred_fallthru
      _
    %p192 = scmp.lt.s32.totalorder %s10, 4
    // Predicated region
    $region17: #{model_forward.1} parent=5 // pred_check
      %p193 = pneg %p192
    $region18: #{model_forward.1} parent=5 // pred_check_branch
      %195 = sbr.rel (%p193) target = $region20
    $region19: #{model_forward.1} parent=5 // pred_region
      // Predicated region
      $region21: #{model_forward.1} parent=19 // pred_check
        %p196 = pneg %p51
      $region22: #{model_forward.1} parent=19 // pred_check_branch
        %198 = sbr.rel (%p196) target = $region24
      $region23: #{model_forward.1} parent=19 // pred_region
        %s199 = smul.u32 3, %s19
        %p200 = scmp.lt.s32.totalorder %s18, 1
        %s201 = scalar_select %p200, %s18, 1
        %p202 = scmp.lt.s32.totalorder %s199, 2
        %s203 = scalar_select %p202, %s199, 2
        %s204 = smul.addr %s201, 3
        %s205 = sadd.s32 %s203, %s204
        %s206 = smul.addr %s205, 4
        %s207 = scalar_lea.vmem %s0, %s206
        %s208 = smul.u32 3, %s19
      $region24: #{model_forward.1} parent=19 // pred_fallthru
        _
      // Predicated region
      $region25: #{model_forward.1} parent=19 // pred_check
        %p209 = pneg %p83
      $region26: #{model_forward.1} parent=19 // pred_check_branch
        %211 = sbr.rel (%p209) target = $region28
      $region27: #{model_forward.1} parent=19 // pred_region
        %s212 = smul.u32 %s18, %s17
        %s213 = smul.u32 %s19, %s17
        %s214 = smul.u32 3, %s213
        %p215 = scmp.lt.s32.totalorder %s212, 1
        %s216 = scalar_select %p215, %s212, 1
        %p217 = scmp.lt.s32.totalorder %s214, 2
        %s218 = scalar_select %p217, %s214, 2
        %s219 = smul.addr %s216, 3
        %s220 = sadd.s32 %s218, %s219
        %s221 = smul.addr %s220, 4
        %s222 = scalar_lea.vmem %s1, %s221
        %s223 = smul.u32 %s18, %s17
        %s224 = smul.u32 %s19, %s17
        %s225 = smul.u32 3, %s224
      $region28: #{model_forward.1} parent=19 // pred_fallthru
        _
      // Predicated region
      $region29: #{model_forward.1} parent=19 // pred_check
        %p226 = pneg %p115
      $region30: #{model_forward.1} parent=19 // pred_check_branch
        %228 = sbr.rel (%p226) target = $region32
      $region31: #{model_forward.1} parent=19 // pred_region
        %s229 = smul.u32 %s18, %s17
        %s230 = smul.u32 %s19, %s17
        %s231 = smul.u32 3, %s230
        %p232 = scmp.lt.s32.totalorder %s229, 1
        %s233 = scalar_select %p232, %s229, 1
        %p234 = scmp.lt.s32.totalorder %s231, 2
        %s235 = scalar_select %p234, %s231, 2
        %s236 = smul.addr %s233, 3
        %s237 = sadd.s32 %s235, %s236
        %s238 = smul.addr %s237, 4
        %s239 = scalar_lea.vmem %s2, %s238
        %s240 = smul.u32 %s18, %s17
        %s241 = smul.u32 %s19, %s17
        %s242 = smul.u32 3, %s241
      $region32: #{model_forward.1} parent=19 // pred_fallthru
        _
    $region20: #{model_forward.1} parent=5 // pred_fallthru
      _
    %p243 = scmp.le.s32.totalorder 1, %s10
    %p244 = scmp.lt.s32.totalorder %s10, 5
    %p245 = pnand %p243, %p244
    %p246 = pneg %p245
    // Predicated region
    $region33: #{model_forward.1} parent=5 // pred_check
      _
    $region34: #{model_forward.1} parent=5 // pred_check_branch
      %248 = sbr.rel (%p245) target = $region36
    $region35: #{model_forward.1} parent=5 // pred_region
      %s249 = ssub.s32 %s10, 1
      %s250 = smul.u32 3, %s22
      %p251 = scmp.lt.s32.totalorder %s21, 1
      %s252 = scalar_select %p251, %s21, 1
      %p253 = scmp.lt.s32.totalorder %s250, 2
      %s254 = scalar_select %p253, %s250, 2
      %s255 = smul.addr %s252, 3
      %s256 = sadd.s32 %s254, %s255
      %s257 = smul.addr %s256, 4
      %s258 = scalar_lea.vmem %s0, %s257
      %p259 = pneg %p57
      %p260 = pneg %p54
      %s261 = smul.u32 %s21, %s20
      %s262 = smul.u32 %s22, %s20
      %s263 = smul.u32 3, %s262
      %p264 = scmp.lt.s32.totalorder %s261, 1
      %s265 = scalar_select %p264, %s261, 1
      %p266 = scmp.lt.s32.totalorder %s263, 2
      %s267 = scalar_select %p266, %s263, 2
      %s268 = smul.addr %s265, 3
      %s269 = sadd.s32 %s267, %s268
      %s270 = smul.addr %s269, 4
      %s271 = scalar_lea.vmem %s1, %s270
      %p272 = pneg %p89
      %p273 = pneg %p86
      %s274 = smul.u32 %s21, %s20
      %s275 = smul.u32 %s22, %s20
      %s276 = smul.u32 3, %s275
      %p277 = scmp.lt.s32.totalorder %s274, 1
      %s278 = scalar_select %p277, %s274, 1
      %p279 = scmp.lt.s32.totalorder %s276, 2
      %s280 = scalar_select %p279, %s276, 2
      %s281 = smul.addr %s278, 3
      %s282 = sadd.s32 %s280, %s281
      %s283 = smul.addr %s282, 4
      %s284 = scalar_lea.vmem %s2, %s283
      %p285 = pneg %p121
      %p286 = pneg %p118
      %p287 = pneg %p142
      %p288 = pneg %p139
      %p289 = pneg %p174
      %p290 = pneg %p171
      %s291 = smul.u32 %s21, %s20
      %s292 = smul.u32 %s22, %s20
      %s293 = smul.u32 3, %s292
      %p294 = scmp.lt.s32.totalorder %s291, 1
      %s295 = scalar_select %p294, %s291, 1
      %p296 = scmp.lt.s32.totalorder %s293, 2
      %s297 = scalar_select %p296, %s293, 2
      %s298 = smul.addr %s295, 6
      %s299 = sadd.s32 %s297, %s298
      %s300 = smul.addr %s299, 8
      %s301 = scalar_lea.vmem %s4, %s300
      %s302 = smul.u32 3, %s22
      %p303 = scmp.lt.s32.totalorder %s21, 1
      %s304 = scalar_select %p303, %s21, 1
      %p305 = scmp.lt.s32.totalorder %s302, 2
      %s306 = scalar_select %p305, %s302, 2
      %s307 = smul.addr %s304, 3
      %s308 = sadd.s32 %s306, %s307
      %s309 = smul.addr %s308, 4
      %s310 = scalar_lea.vmem %s0, %s309
      %s311 = smul.u32 3, %s22
      %s312 = smul.u32 %s21, %s20
      %s313 = smul.u32 %s22, %s20
      %s314 = smul.u32 3, %s313
      %p315 = scmp.lt.s32.totalorder %s312, 1
      %s316 = scalar_select %p315, %s312, 1
      %p317 = scmp.lt.s32.totalorder %s314, 2
      %s318 = scalar_select %p317, %s314, 2
      %s319 = smul.addr %s316, 3
      %s320 = sadd.s32 %s318, %s319
      %s321 = smul.addr %s320, 4
      %s322 = scalar_lea.vmem %s1, %s321
      %s323 = smul.u32 %s21, %s20
      %s324 = smul.u32 %s22, %s20
      %s325 = smul.u32 3, %s324
      %s326 = smul.u32 %s21, %s20
      %s327 = smul.u32 %s22, %s20
      %s328 = smul.u32 3, %s327
      %p329 = scmp.lt.s32.totalorder %s326, 1
      %s330 = scalar_select %p329, %s326, 1
      %p331 = scmp.lt.s32.totalorder %s328, 2
      %s332 = scalar_select %p331, %s328, 2
      %s333 = smul.addr %s330, 3
      %s334 = sadd.s32 %s332, %s333
      %s335 = smul.addr %s334, 4
      %s336 = scalar_lea.vmem %s2, %s335
      %s337 = smul.u32 %s21, %s20
      %s338 = smul.u32 %s22, %s20
      %s339 = smul.u32 3, %s338
      %s340 = smul.u32 %s21, %s20
      %s341 = smul.u32 %s22, %s20
      %s342 = smul.u32 3, %s341
      %p343 = scmp.lt.s32.totalorder %s340, 1
      %s344 = scalar_select %p343, %s340, 1
      %p345 = scmp.lt.s32.totalorder %s342, 2
      %s346 = scalar_select %p345, %s342, 2
      %s347 = smul.addr %s344, 6
      %s348 = sadd.s32 %s346, %s347
      %s349 = smul.addr %s348, 8
      %s350 = scalar_lea.vmem %s4, %s349
      %s351 = smul.u32 %s21, %s20
      %s352 = smul.u32 %s22, %s20
      %s353 = smul.u32 3, %s352
      %v354 = vld [vmem:[%s3] sm:$0xff]
      %v355 = vld [vmem:[%s310] sm:$0x77]
      %v356 = vld [vmem:[%s310 + $0x8] sm:$0x7]
      %358 = vset.pattern.permute.xlu0 0
      %359 = vperm.xlu0 %358, %v354
      %v360 = vpop.permute.xlu0 %359
      %v364 = vlaneseq
      %v365 = vshrl.u32 %v364, 7
      %v366 = vsub.s32 0, %v365
      %v367 = vrot.slane %v355, %v366
      %v368 = vlaneseq
      %v369 = vshrl.u32 %v368, 7
      %v370 = vsub.s32 4, %v369
      %v371 = vrot.slane %v355, %v370
      %v372 = vlaneseq
      %v373 = vshrl.u32 %v372, 7
      %v374 = vsub.s32 0, %v373
      %v375 = vrot.slane %v356, %v374
      %v379 = vlaneseq
      %v380 = vshrl.u32 %v379, 7
      %v381 = vsub.s32 0, %v380
      %v382 = vrot.slane %v367, %v381
      %v383 = vlaneseq
      %v384 = vshrl.u32 %v383, 7
      %v385 = vsub.s32 0, %v384
      %v386 = vrot.slane %v371, %v385
      %v387 = vlaneseq
      %v388 = vshrl.u32 %v387, 7
      %v389 = vsub.s32 0, %v388
      %v390 = vrot.slane %v375, %v389
      %v391 = vmul.f32 %v360, %v382
      %v392 = vmul.f32 %v360, %v386
      %v393 = vmul.f32 %v360, %v390
      %394 = vset.pattern.permute.xlu0 1
      %395 = vperm.xlu0 %394, %v354
      %v396 = vpop.permute.xlu0 %395
      %v398 = vlaneseq
      %v399 = vshrl.u32 %v398, 7
      %v400 = vsub.s32 1, %v399
      %v401 = vrot.slane %v355, %v400
      %v402 = vlaneseq
      %v403 = vshrl.u32 %v402, 7
      %v404 = vsub.s32 5, %v403
      %v405 = vrot.slane %v355, %v404
      %v406 = vlaneseq
      %v407 = vshrl.u32 %v406, 7
      %v408 = vsub.s32 1, %v407
      %v409 = vrot.slane %v356, %v408
      %v413 = vlaneseq
      %v414 = vshrl.u32 %v413, 7
      %v415 = vsub.s32 1, %v414
      %v416 = vrot.slane %v401, %v415
      %v417 = vlaneseq
      %v418 = vshrl.u32 %v417, 7
      %v419 = vsub.s32 1, %v418
      %v420 = vrot.slane %v405, %v419
      %v421 = vlaneseq
      %v422 = vshrl.u32 %v421, 7
      %v423 = vsub.s32 1, %v422
      %v424 = vrot.slane %v409, %v423
      %v425 = vmul.f32 %v396, %v416
      %v426 = vmul.f32 %v396, %v420
      %v427 = vmul.f32 %v396, %v424
      %v428 = vadd.f32 %v391, %v425
      %v429 = vadd.f32 %v392, %v426
      %v430 = vadd.f32 %v393, %v427
      %431 = vset.pattern.permute.xlu0 2
      %432 = vperm.xlu0 %431, %v354
      %v433 = vpop.permute.xlu0 %432
      %v435 = vlaneseq
      %v436 = vshrl.u32 %v435, 7
      %v437 = vsub.s32 2, %v436
      %v438 = vrot.slane %v355, %v437
      %v439 = vlaneseq
      %v440 = vshrl.u32 %v439, 7
      %v441 = vsub.s32 6, %v440
      %v442 = vrot.slane %v355, %v441
      %v443 = vlaneseq
      %v444 = vshrl.u32 %v443, 7
      %v445 = vsub.s32 2, %v444
      %v446 = vrot.slane %v356, %v445
      %v450 = vlaneseq
      %v451 = vshrl.u32 %v450, 7
      %v452 = vsub.s32 2, %v451
      %v453 = vrot.slane %v438, %v452
      %v454 = vlaneseq
      %v455 = vshrl.u32 %v454, 7
      %v456 = vsub.s32 2, %v455
      %v457 = vrot.slane %v442, %v456
      %v458 = vlaneseq
      %v459 = vshrl.u32 %v458, 7
      %v460 = vsub.s32 2, %v459
      %v461 = vrot.slane %v446, %v460
      %v462 = vmul.f32 %v433, %v453
      %v463 = vmul.f32 %v433, %v457
      %v464 = vmul.f32 %v433, %v461
      %v465 = vadd.f32 %v428, %v462
      %v466 = vadd.f32 %v429, %v463
      %v467 = vadd.f32 %v430, %v464
      %p468 = scmp.eq.s32.totalorder %s20, 0
      %p469 = scmp.eq.s32.totalorder %s21, 0
      %p470 = pnand %p468, %p469
      %p471 = pneg %p470
      %p472 = scmp.eq.s32.totalorder %s22, 0
      %p473 = pnand %p471, %p472
      %p474 = pneg %p473
      // Predicated region
      $region37: #{model_forward.1} parent=35 // pred_check
        _
      $region38: #{model_forward.1} parent=35 // pred_check_branch
        %476 = sbr.rel (%p473) target = $region40
      $region39: #{model_forward.1} parent=35 // pred_region
        %vm477 = vcmask 7168
        %478 = vst.msk [vmem:[#allocation2] sm:$0xff] %vm477, 0.0
        %479 = vst.msk [vmem:[#allocation3] sm:$0xff] %vm477, 0.0
      $region40: #{model_forward.1} parent=35 // pred_fallthru
        _
      // Predicated region
      $region41: #{model_forward.1} parent=35 // pred_check
        %p480 = pneg %p468
      $region42: #{model_forward.1} parent=35 // pred_check_branch
        %482 = sbr.rel (%p480) target = $region44
      $region43: #{model_forward.1} parent=35 // pred_region
        %v483 = vld [vmem:[#allocation2] sm:$0xff]
        %v484 = vadd.f32 %v465, %v466
        %v485 = vadd.f32 %v484, %v467
        %486 = vadd.xlane.f32.xlu0 %v485
        %v487 = vpop.xlane.xlu0 %486
        %v488 = vadd.f32 %v483, %v487
        %vm489 = vcmask 7168
        %490 = vst.msk [vmem:[#allocation2] sm:$0xff] %vm489, %v488
        %v491 = vld [vmem:[#allocation3] sm:$0xff]
        %v492 = vmul.f32 %v465, %v465
        %v493 = vmul.f32 %v466, %v466
        %v494 = vmul.f32 %v467, %v467
        %v495 = vadd.f32 %v492, %v493
        %v496 = vadd.f32 %v495, %v494
        %497 = vadd.xlane.f32.xlu0 %v496
        %v498 = vpop.xlane.xlu0 %497
        %v499 = vadd.f32 %v491, %v498
        %500 = vst.msk [vmem:[#allocation3] sm:$0xff] %vm489, %v499
      $region44: #{model_forward.1} parent=35 // pred_fallthru
        _
      %p501 = scmp.eq.s32.totalorder %s20, 1
      // Predicated region
      $region45: #{model_forward.1} parent=35 // pred_check
        %p502 = pneg %p501
      $region46: #{model_forward.1} parent=35 // pred_check_branch
        %504 = sbr.rel (%p502) target = $region48
      $region47: #{model_forward.1} parent=35 // pred_region
        %v505 = vld [vmem:[#allocation2] sm:$0xff]
        %v506 = vmul.f32 %v505, 0.0015432099
        %v507 = vld [vmem:[#allocation3] sm:$0xff]
        %v508 = vmul.f32 %v507, 0.0015432099
        %v509 = vmul.f32 %v506, %v506
        %v510 = vsub.f32 %v508, %v509
        %v511 = vmax.f32 %v510, 0.0
        %v512 = vadd.f32 %v511, 1e-05
        %v513 = vrsqrt.pop %v512
        %515 = vrot.lane.b32.xlu0 %v513, 7
        %v516 = vpop.permute.xlu0 %515
        %v518 = vmul.f32 %v354, %v516
        %520 = vrot.lane.b32.xlu0 %v518, 121
        %v521 = vpop.permute.xlu0 %520
        %v523 = vmul.f32 %v506, %v521
        %525 = vrot.lane.b32.xlu0 %v523, 8
        %v526 = vpop.permute.xlu0 %525
        %v528 = vsub.f32 %v354, %v526
        %529 = vrot.lane.b32.xlu0 %v354, 2
        %v530 = vpop.permute.xlu0 %529
        %v532 = vadd.f32 %v528, %v530
        %v533 = vld [vmem:[%s322] sm:$0x77]
        %v534 = vld [vmem:[%s322 + $0x8] sm:$0x7]
        %535 = vset.pattern.permute.xlu0 3
        %536 = vperm.xlu0 %535, %v354
        %v537 = vpop.permute.xlu0 %536
        %v541 = vlaneseq
        %v542 = vshrl.u32 %v541, 7
        %v543 = vsub.s32 0, %v542
        %v544 = vrot.slane %v533, %v543
        %v545 = vlaneseq
        %v546 = vshrl.u32 %v545, 7
        %v547 = vsub.s32 4, %v546
        %v548 = vrot.slane %v533, %v547
        %v549 = vlaneseq
        %v550 = vshrl.u32 %v549, 7
        %v551 = vsub.s32 0, %v550
        %v552 = vrot.slane %v534, %v551
        %v556 = vlaneseq
        %v557 = vshrl.u32 %v556, 7
        %v558 = vsub.s32 0, %v557
        %v559 = vrot.slane %v544, %v558
        %v560 = vlaneseq
        %v561 = vshrl.u32 %v560, 7
        %v562 = vsub.s32 0, %v561
        %v563 = vrot.slane %v548, %v562
        %v564 = vlaneseq
        %v565 = vshrl.u32 %v564, 7
        %v566 = vsub.s32 0, %v565
        %v567 = vrot.slane %v552, %v566
        %v568 = vmul.f32 %v537, %v559
        %v569 = vmul.f32 %v537, %v563
        %v570 = vmul.f32 %v537, %v567
        %571 = vset.pattern.permute.xlu0 4
        %572 = vperm.xlu0 %571, %v354
        %v573 = vpop.permute.xlu0 %572
        %v575 = vlaneseq
        %v576 = vshrl.u32 %v575, 7
        %v577 = vsub.s32 1, %v576
        %v578 = vrot.slane %v533, %v577
        %v579 = vlaneseq
        %v580 = vshrl.u32 %v579, 7
        %v581 = vsub.s32 5, %v580
        %v582 = vrot.slane %v533, %v581
        %v583 = vlaneseq
        %v584 = vshrl.u32 %v583, 7
        %v585 = vsub.s32 1, %v584
        %v586 = vrot.slane %v534, %v585
        %v590 = vlaneseq
        %v591 = vshrl.u32 %v590, 7
        %v592 = vsub.s32 1, %v591
        %v593 = vrot.slane %v578, %v592
        %v594 = vlaneseq
        %v595 = vshrl.u32 %v594, 7
        %v596 = vsub.s32 1, %v595
        %v597 = vrot.slane %v582, %v596
        %v598 = vlaneseq
        %v599 = vshrl.u32 %v598, 7
        %v600 = vsub.s32 1, %v599
        %v601 = vrot.slane %v586, %v600
        %v602 = vmul.f32 %v573, %v593
        %v603 = vmul.f32 %v573, %v597
        %v604 = vmul.f32 %v573, %v601
        %v605 = vadd.f32 %v568, %v602
        %v606 = vadd.f32 %v569, %v603
        %v607 = vadd.f32 %v570, %v604
        %608 = vset.pattern.permute.xlu0 5
        %609 = vperm.xlu0 %608, %v354
        %v610 = vpop.permute.xlu0 %609
        %v612 = vlaneseq
        %v613 = vshrl.u32 %v612, 7
        %v614 = vsub.s32 2, %v613
        %v615 = vrot.slane %v533, %v614
        %v616 = vlaneseq
        %v617 = vshrl.u32 %v616, 7
        %v618 = vsub.s32 6, %v617
        %v619 = vrot.slane %v533, %v618
        %v620 = vlaneseq
        %v621 = vshrl.u32 %v620, 7
        %v622 = vsub.s32 2, %v621
        %v623 = vrot.slane %v534, %v622
        %v627 = vlaneseq
        %v628 = vshrl.u32 %v627, 7
        %v629 = vsub.s32 2, %v628
        %v630 = vrot.slane %v615, %v629
        %v631 = vlaneseq
        %v632 = vshrl.u32 %v631, 7
        %v633 = vsub.s32 2, %v632
        %v634 = vrot.slane %v619, %v633
        %v635 = vlaneseq
        %v636 = vshrl.u32 %v635, 7
        %v637 = vsub.s32 2, %v636
        %v638 = vrot.slane %v623, %v637
        %v639 = vmul.f32 %v610, %v630
        %v640 = vmul.f32 %v610, %v634
        %v641 = vmul.f32 %v610, %v638
        %v642 = vadd.f32 %v605, %v639
        %v643 = vadd.f32 %v606, %v640
        %v644 = vadd.f32 %v607, %v641
        %645 = vset.pattern.permute.xlu0 7
        %646 = vperm.xlu0 %645, %v518
        %v647 = vpop.permute.xlu0 %646
        %v649 = vmul.f32 %v465, %v647
        %v650 = vmul.f32 %v466, %v647
        %v651 = vmul.f32 %v467, %v647
        %v652 = vadd.f32 %v649, %v642
        %v653 = vadd.f32 %v650, %v643
        %v654 = vadd.f32 %v651, %v644
        %656 = vset.pattern.permute.xlu0 8
        %657 = vperm.xlu0 %656, %v532
        %v658 = vpop.permute.xlu0 %657
        %v660 = vadd.f32 %v652, %v658
        %v661 = vadd.f32 %v653, %v658
        %v662 = vadd.f32 %v654, %v658
        %v663 = vmax.f32 %v660, 0.0
        %v664 = vmax.f32 %v661, 0.0
        %v665 = vmax.f32 %v662, 0.0
        %v666 = vmin.f32 %v663, 6.0
        %v667 = vmin.f32 %v664, 6.0
        %v668 = vmin.f32 %v665, 6.0
        %669 = vst [vmem:[%s350] sm:$0xff] %v666
        %670 = vst [vmem:[%s350 + $0x8] sm:$0xff] %v667
        %671 = vst [vmem:[%s350 + $0x10] sm:$0xff] %v668
        %v672 = vld [vmem:[%s336] sm:$0x77]
        %v673 = vld [vmem:[%s336 + $0x8] sm:$0x7]
        %v675 = vcombine.high %v672, %v672
        %677 = vst [vmem:[%s350 + $0x18] sm:$0x7] %v672
        %678 = vst [vmem:[%s350 + $0x20] sm:$0x7] %v675
        %679 = vst [vmem:[%s350 + $0x28] sm:$0x7] %v673
      $region48: #{model_forward.1} parent=35 // pred_fallthru
        _
      %s680 = smul.u32 %s21, %s20
      %s681 = smul.u32 %s22, %s20
      %s682 = smul.u32 3, %s681
      %p683 = scmp.lt.s32.totalorder %s680, 1
      %s684 = scalar_select %p683, %s680, 1
      %p685 = scmp.lt.s32.totalorder %s682, 2
      %s686 = scalar_select %p685, %s682, 2
      %s687 = smul.addr %s684, 6
      %s688 = sadd.s32 %s686, %s687
      %s689 = smul.addr %s688, 8
      %s690 = scalar_lea.vmem %s4, %s689
      // Predicated region
      $region49: #{model_forward.1} parent=35 // pred_check
        %p691 = pneg %p171
      $region50: #{model_forward.1} parent=35 // pred_check_branch
        %693 = sbr.rel (%p691) target = $region52
      $region51: #{model_forward.1} parent=35 // pred_region
        %s694 = smul.u32 %s21, %s20
        %s695 = smul.u32 %s22, %s20
        %s696 = smul.u32 3, %s695
      $region52: #{model_forward.1} parent=35 // pred_fallthru
        _
    $region36: #{model_forward.1} parent=5 // pred_fallthru
      _
    %p697 = scmp.le.s32.totalorder 2, %s10
    // Predicated region
    $region53: #{model_forward.1} parent=5 // pred_check
      %p698 = pneg %p697
    $region54: #{model_forward.1} parent=5 // pred_check_branch
      %700 = sbr.rel (%p698) target = $region56
    $region55: #{model_forward.1} parent=5 // pred_region
      %s701 = ssub.s32 %s10, 2
      // Predicated region
      $region57: #{model_forward.1} parent=55 // pred_check
        %p702 = pneg %p177
      $region58: #{model_forward.1} parent=55 // pred_check_branch
        %704 = sbr.rel (%p702) target = $region60
      $region59: #{model_forward.1} parent=55 // pred_region
        %s705 = smul.u32 %s24, %s23
        %s706 = smul.u32 %s25, %s23
        %s707 = smul.u32 3, %s706
        %p708 = scmp.lt.s32.totalorder %s705, 1
        %s709 = scalar_select %p708, %s705, 1
        %p710 = scmp.lt.s32.totalorder %s707, 2
        %s711 = scalar_select %p710, %s707, 2
        %s712 = smul.addr %s709, 6
        %s713 = sadd.s32 %s711, %s712
        %s714 = smul.addr %s713, 8
        %s715 = scalar_lea.vmem %s4, %s714
      $region60: #{model_forward.1} parent=55 // pred_fallthru
        _
    $region56: #{model_forward.1} parent=5 // pred_fallthru
      _
  $region6: #{model_forward.1} parent=0 // loop_footer
    %s14 = sadd.s32 1, %s10
  $region7: #{model_forward.1} parent=0 // loop_footer_branch
    %9 = sbr.rel target = $region3
  $region8: #{model_forward.1} parent=0 // loop_exit
    _

</llo_original>
